<compile_context>
chip_gen: v6e
topology: v6e:2x2x1
jax: 0.10.0
libtpu: 0.0.40
codegen_flags: <defaults>
</compile_context>

<pallas_src>
import jax
import jax.numpy as jnp
from jax.experimental import pallas as pl
from jax.experimental.pallas import tpu as pltpu


# ---------------------------------------------------------------------------
# Kernels
# ---------------------------------------------------------------------------
def ingr_mlp_kernel_resident(x_ref, w1_ref, b1_ref, w2_ref, b2_ref, w3_ref,
                             b3_ref, o_ref):
    """Fused 3-layer MLP, W1 fully VMEM-resident (grid = (batch_tiles,))."""
    h1 = jnp.dot(x_ref[...].astype(jnp.bfloat16), w1_ref[...],
                 preferred_element_type=jnp.float32) + b1_ref[...]
    h1 = jnp.maximum(h1, 0.0)
    h2 = jnp.dot(h1.astype(jnp.bfloat16), w2_ref[...],
                 preferred_element_type=jnp.float32) + b2_ref[...]
    h2 = jnp.maximum(h2, 0.0)
    out = jnp.dot(h2.astype(jnp.bfloat16), w3_ref[...],
                  preferred_element_type=jnp.float32) + b3_ref[...]
    o_ref[...] = out.astype(o_ref.dtype)


def ingr_mlp_kernel_ktiled(x_ref, w1_ref, b1_ref, w2_ref, b2_ref, w3_ref,
                           b3_ref, o_ref, h1_acc):
    """Huge-vocab path. Grid = (kt, bt), k OUTER so each W1 slab is read from HBM
    exactly once; per-batch-tile f32 accumulator lives in VMEM scratch."""
    k = pl.program_id(0)
    i = pl.program_id(1)

    @pl.when(k == 0)
    def _():
        h1_acc[i] = jnp.zeros(h1_acc.shape[1:], h1_acc.dtype)

    h1_acc[i] += jnp.dot(x_ref[...].astype(jnp.bfloat16), w1_ref[...],
                         preferred_element_type=jnp.float32)

    @pl.when(k == pl.num_programs(0) - 1)
    def _():
        h1 = jnp.maximum(h1_acc[i] + b1_ref[...], 0.0)
        h2 = jnp.dot(h1.astype(jnp.bfloat16), w2_ref[...],
                     preferred_element_type=jnp.float32) + b2_ref[...]
        h2 = jnp.maximum(h2, 0.0)
        out = jnp.dot(h2.astype(jnp.bfloat16), w3_ref[...],
                      preferred_element_type=jnp.float32) + b3_ref[...]
        o_ref[...] = out.astype(o_ref.dtype)


# ---------------------------------------------------------------------------
# Packing (one-time) + forward wrapper
# ---------------------------------------------------------------------------
def _round_up(x, m):
    return ((x + m - 1) // m) * m


def _vmem_capacity_bytes():
    try:
        return int(pltpu.get_tpu_info().vmem_capacity_bytes)
    except Exception:
        return 64 << 20  # conservative fallback (v7x per-core VMEM)


def pack_params(params, *, block_k=None, vmem_capacity=None):
    """One-time prep: pad feature dims to multiples of 128, pad the ingredient
    vocabulary to the chosen K tiling, and cast matmul operands to bf16.
    Do this at init and reuse across calls (avoids per-step W1 re-pad traffic)."""
    w1, b1 = params["w1"], params["b1"]
    w2, b2 = params["w2"], params["b2"]
    w3, b3 = params["w3"], params["b3"]
    n_ingr, h1 = w1.shape
    h2 = w2.shape[1]
    emb_dim = w3.shape[1]
    h1p, h2p, embp = (_round_up(d, 128) for d in (h1, h2, emb_dim))

    if vmem_capacity is None:
        vmem_capacity = _vmem_capacity_bytes()

    if block_k is None:
        n128 = _round_up(n_ingr, 128)
        # Resident if double-buffered bf16 W1 (plus the small W2/W3/buffers) fits
        # with headroom: ~35% of physical VMEM (~22 MiB on v7x, ~45 MiB on v5e/v6e).
        if n128 * h1p * 2 <= int(0.35 * vmem_capacity):
            block_k = n128               # kt == 1 -> W1 fully VMEM resident
        else:
            block_k = 2048               # deep K slabs for the streamed path
    n_ingr_p = _round_up(n_ingr, block_k)
    kt = n_ingr_p // block_k

    def padw(w, rp, cp):
        return jnp.pad(w, ((0, rp - w.shape[0]), (0, cp - w.shape[1]))).astype(jnp.bfloat16)

    def padb(b, cp):
        b = b.astype(jnp.float32).reshape(1, -1)
        return jnp.pad(b, ((0, 0), (0, cp - b.shape[1])))

    return dict(
        w1=padw(w1, n_ingr_p, h1p), b1=padb(b1, h1p),
        w2=padw(w2, h1p, h2p),      b2=padb(b2, h2p),
        w3=padw(w3, h2p, embp),     b3=padb(b3, embp),
        meta=dict(n_ingr=n_ingr, n_ingr_p=n_ingr_p, block_k=block_k, kt=kt,
                  h1p=h1p, h2p=h2p, emb_dim=emb_dim, embp=embp,
                  vmem_capacity=vmem_capacity),
    )


def ingr_embed_forward(ingr, packed, *, block_b=None):
    """ingr: (B, numofingr) float32; packed: output of pack_params().
    Returns (B, emb_dim) float32."""
    m = packed["meta"]
    B, n_ingr = ingr.shape
    assert n_ingr == m["n_ingr"], "input width must match packed params"
    n_ingr_p, block_k, kt = m["n_ingr_p"], m["block_k"], m["kt"]
    h1p, h2p, embp, emb_dim = m["h1p"], m["h2p"], m["embp"], m["emb_dim"]

    # ---- batch tiling: pad B so block_b divides it; aim for an even 2-way split
    #      of the parallel batch axis (v7x megacore) when B allows ----
    if block_b is None:
        if B <= 8:
            block_b = 8
        elif B <= 512:
            block_b = _round_up(pl.cdiv(B, 2), 8)   # bt == 2 -> both v7x cores busy
        else:
            block_b = 256
    bt = pl.cdiv(B, block_b)
    B_p = bt * block_b

    # ---- x: only pad when genuinely required (fuse the bf16 cast into the pad);
    #      otherwise pass f32 through and cast inside the kernel ----
    if (B_p, n_ingr_p) != (B, n_ingr):
        x = jnp.pad(ingr.astype(jnp.bfloat16),
                    ((0, B_p - B), (0, n_ingr_p - n_ingr)))
    else:
        x = ingr
    x_bytes = x.dtype.itemsize

    # ---- VMEM budget: single estimate (double-buffer factors included once),
    #      capped at ~85% of physical VMEM for Mosaic headroom ----
    f32, bf = 4, 2
    est = (2 * block_b * block_k * x_bytes                        # x tile (2 bufs)
           + 2 * (block_k * h1p + h1p * h2p + h2p * embp) * bf    # weights (2 bufs)
           + 2 * (h1p + h2p + embp) * f32                         # biases
           + 2 * block_b * embp * f32                             # out tile
           + block_b * (h1p + h2p) * f32                          # live h1/h2
           + (0 if kt == 1 else bt * block_b * h1p * f32))        # K-path accumulator
    cap = int(0.85 * m["vmem_capacity"])
    vmem_limit = int(min(max(est + (8 << 20), 32 << 20), cap))

    args = (x, packed["w1"], packed["b1"], packed["w2"], packed["b2"],
            packed["w3"], packed["b3"])

    if kt == 1:
        # ---- W1 resident: single "parallel" batch grid axis, no accumulator ----
        const2 = lambda i: (0, 0)
        # TODO(synk): mark the constant-index weight specs pipeline_mode=pl.Buffered(1)
        # on v7x to drop their dead second pipeline buffer (halves resident footprint).
        out_padded = pl.pallas_call(
            ingr_mlp_kernel_resident,
            out_shape=jax.ShapeDtypeStruct((B_p, embp), jnp.float32),
            grid_spec=pltpu.PrefetchScalarGridSpec(
                num_scalar_prefetch=0,
                grid=(bt,),
                in_specs=[
                    pl.BlockSpec((block_b, n_ingr_p), lambda i: (i, 0)),  # x tile
                    pl.BlockSpec((n_ingr_p, h1p), const2),                # W1 (resident)
                    pl.BlockSpec((1, h1p), const2),                       # b1
                    pl.BlockSpec((h1p, h2p), const2),                     # W2
                    pl.BlockSpec((1, h2p), const2),                       # b2
                    pl.BlockSpec((h2p, embp), const2),                    # W3
                    pl.BlockSpec((1, embp), const2),                      # b3
                ],
                out_specs=pl.BlockSpec((block_b, embp), lambda i: (i, 0)),
            ),
            compiler_params=pltpu.CompilerParams(
                dimension_semantics=("parallel",),
                vmem_limit_bytes=vmem_limit,
            ),
        )(*args)
    else:
        # ---- huge vocab: k OUTER so each W1 slab streams from HBM exactly once;
        #      batch inner.  (k must stay outermost, so both axes are "arbitrary".)
        const2 = lambda k, i: (0, 0)
        out_padded = pl.pallas_call(
            ingr_mlp_kernel_ktiled,
            out_shape=jax.ShapeDtypeStruct((B_p, embp), jnp.float32),
            grid_spec=pltpu.PrefetchScalarGridSpec(
                num_scalar_prefetch=0,
                grid=(kt, bt),
                in_specs=[
                    pl.BlockSpec((block_b, block_k), lambda k, i: (i, k)),  # x tile
                    pl.BlockSpec((block_k, h1p), lambda k, i: (k, 0)),      # W1 K-slab
                    pl.BlockSpec((1, h1p), const2),                         # b1
                    pl.BlockSpec((h1p, h2p), const2),                       # W2
                    pl.BlockSpec((1, h2p), const2),                         # b2
                    pl.BlockSpec((h2p, embp), const2),                      # W3
                    pl.BlockSpec((1, embp), const2),                        # b3
                ],
                out_specs=pl.BlockSpec((block_b, embp), lambda k, i: (i, 0)),
                scratch_shapes=[pltpu.VMEM((bt, block_b, h1p), jnp.float32)],
            ),
            compiler_params=pltpu.CompilerParams(
                dimension_semantics=("arbitrary", "arbitrary"),
                vmem_limit_bytes=vmem_limit,
            ),
        )(*args)

    # Slice back only when padding actually happened (module contract: (B, emb_dim)).
    if (B_p, embp) != (B, emb_dim):
        out_padded = out_padded[:B, :emb_dim]
    return out_padded


# ---------------------------------------------------------------------------
# Deterministic parameter init (shapes from the module's __init__) + reference
# ---------------------------------------------------------------------------
def init_params(key, numofingr, emb_dim, h1=300, h2=500):
    ks = jax.random.split(key, 6)

    def linear(kw, kb, fan_in, fan_out):
        # torch.nn.Linear default: U(-1/sqrt(fan_in), 1/sqrt(fan_in))
        bound = 1.0 / jnp.sqrt(fan_in)
        w = jax.random.uniform(kw, (fan_in, fan_out), jnp.float32, -bound, bound)
        b = jax.random.uniform(kb, (1, fan_out), jnp.float32, -bound, bound)
        return w, b

    w1, b1 = linear(ks[0], ks[1], numofingr, h1)
    w2, b2 = linear(ks[2], ks[3], h1, h2)
    w3, b3 = linear(ks[4], ks[5], h2, emb_dim)
    return dict(w1=w1, b1=b1, w2=w2, b2=b2, w3=w3, b3=b3)


def reference_forward(ingr, p):
    h = jnp.maximum(ingr @ p["w1"] + p["b1"], 0.0)
    h = jnp.maximum(h @ p["w2"] + p["b2"], 0.0)
    return h @ p["w3"] + p["b3"]


if __name__ == "__main__":
    key = jax.random.PRNGKey(0)

    # ---- config 1: small vocab -> W1-resident path (kt == 1) ----
    batch, numofingr, emb_dim = 8, 32, 64
    k_x, k_p, key = jax.random.split(key, 3)
    ingr = jax.random.uniform(k_x, (batch, numofingr), jnp.float32)
    params = init_params(k_p, numofingr, emb_dim)
    packed = pack_params(params)                      # one-time pack (pad + bf16)
    out = jax.block_until_ready(ingr_embed_forward(ingr, packed))
    ref = reference_forward(ingr, params)
    assert out.shape == (batch, emb_dim)
    assert jnp.allclose(out, ref, atol=5e-2, rtol=5e-2), "resident path mismatch"

    # ---- config 2: force the K-tiled (k-outer) path to validate it too ----
    batch2, numofingr2, emb_dim2 = 16, 300, 64
    k_x2, k_p2, key = jax.random.split(key, 3)
    ingr2 = jax.random.uniform(k_x2, (batch2, numofingr2), jnp.float32)
    params2 = init_params(k_p2, numofingr2, emb_dim2)
    packed2 = pack_params(params2, block_k=128)       # 300 -> 384 padded, kt = 3
    out2 = jax.block_until_ready(ingr_embed_forward(ingr2, packed2))
    ref2 = reference_forward(ingr2, params2)
    assert out2.shape == (batch2, emb_dim2)
    assert jnp.allclose(out2, ref2, atol=5e-2, rtol=5e-2), "k-tiled path mismatch"

    print("KERNEL_OK")
</pallas_src>

<mosaic_0001>
module attributes {stable_mosaic.version = 11 : i64} {
  func.func @ingr_mlp_kernel_resident(%arg0: i32, %arg1: memref<8x128xbf16, #tpu.memory_space<vmem>>, %arg2: memref<128x384xbf16, #tpu.memory_space<vmem>>, %arg3: memref<1x384xf32, #tpu.memory_space<vmem>>, %arg4: memref<384x512xbf16, #tpu.memory_space<vmem>>, %arg5: memref<1x512xf32, #tpu.memory_space<vmem>>, %arg6: memref<512x128xbf16, #tpu.memory_space<vmem>>, %arg7: memref<1x128xf32, #tpu.memory_space<vmem>>, %arg8: memref<8x128xf32, #tpu.memory_space<vmem>>) attributes {dimension_semantics = [#tpu.dimension_semantics<parallel>], iteration_bounds = array<i64: 1>, scalar_prefetch = 0 : i64, scratch_operands = 0 : i64, tpu.core_type = #tpu.core_type<tc>, window_params = [{transform_indices = @transform_0, window_bounds = array<i64: 8, 128>}, {pipeline_mode = #tpu.pipeline_mode<synchronous>, transform_indices = @transform_1, window_bounds = array<i64: 128, 384>}, {pipeline_mode = #tpu.pipeline_mode<synchronous>, transform_indices = @transform_2, window_bounds = array<i64: 1, 384>}, {pipeline_mode = #tpu.pipeline_mode<synchronous>, transform_indices = @transform_3, window_bounds = array<i64: 384, 512>}, {pipeline_mode = #tpu.pipeline_mode<synchronous>, transform_indices = @transform_4, window_bounds = array<i64: 1, 512>}, {pipeline_mode = #tpu.pipeline_mode<synchronous>, transform_indices = @transform_5, window_bounds = array<i64: 512, 128>}, {pipeline_mode = #tpu.pipeline_mode<synchronous>, transform_indices = @transform_6, window_bounds = array<i64: 1, 128>}, {transform_indices = @transform_7, window_bounds = array<i64: 8, 128>}]} {
    %c0 = arith.constant 0 : index
    %c0_0 = arith.constant 0 : index
    %0 = vector.load %arg1[%c0, %c0_0] : memref<8x128xbf16, #tpu.memory_space<vmem>>, vector<8x128xbf16>
    %c0_1 = arith.constant 0 : index
    %c0_2 = arith.constant 0 : index
    %1 = vector.load %arg2[%c0_1, %c0_2] : memref<128x384xbf16, #tpu.memory_space<vmem>>, vector<128x384xbf16>
    %cst = arith.constant dense<0.000000e+00> : vector<8x384xf32>
    %2 = tpu.matmul %0, %1, %cst {dimension_numbers = #tpu.dot_dimension_numbers<[1], [0], [0], [1], [0, 0, 1, 1], [], []>} : vector<8x128xbf16>, vector<128x384xbf16>, vector<8x384xf32> -> vector<8x384xf32>
    %c0_3 = arith.constant 0 : index
    %c0_4 = arith.constant 0 : index
    %3 = vector.load %arg3[%c0_3, %c0_4] : memref<1x384xf32, #tpu.memory_space<vmem>>, vector<1x384xf32>
    %4 = vector.broadcast %3 : vector<1x384xf32> to vector<8x384xf32>
    %5 = arith.addf %2, %4 : vector<8x384xf32>
    %cst_5 = arith.constant 0.000000e+00 : f32
    %6 = vector.broadcast %cst_5 : f32 to vector<8x384xf32>
    %7 = arith.maximumf %5, %6 : vector<8x384xf32>
    %8 = arith.truncf %7 : vector<8x384xf32> to vector<8x384xbf16>
    %c0_6 = arith.constant 0 : index
    %c0_7 = arith.constant 0 : index
    %9 = vector.load %arg4[%c0_6, %c0_7] : memref<384x512xbf16, #tpu.memory_space<vmem>>, vector<384x512xbf16>
    %cst_8 = arith.constant dense<0.000000e+00> : vector<8x512xf32>
    %10 = tpu.matmul %8, %9, %cst_8 {dimension_numbers = #tpu.dot_dimension_numbers<[1], [0], [0], [1], [0, 0, 1, 1], [], []>} : vector<8x384xbf16>, vector<384x512xbf16>, vector<8x512xf32> -> vector<8x512xf32>
    %c0_9 = arith.constant 0 : index
    %c0_10 = arith.constant 0 : index
    %11 = vector.load %arg5[%c0_9, %c0_10] : memref<1x512xf32, #tpu.memory_space<vmem>>, vector<1x512xf32>
    %12 = vector.broadcast %11 : vector<1x512xf32> to vector<8x512xf32>
    %13 = arith.addf %10, %12 : vector<8x512xf32>
    %cst_11 = arith.constant 0.000000e+00 : f32
    %14 = vector.broadcast %cst_11 : f32 to vector<8x512xf32>
    %15 = arith.maximumf %13, %14 : vector<8x512xf32>
    %16 = arith.truncf %15 : vector<8x512xf32> to vector<8x512xbf16>
    %c0_12 = arith.constant 0 : index
    %c0_13 = arith.constant 0 : index
    %17 = vector.load %arg6[%c0_12, %c0_13] : memref<512x128xbf16, #tpu.memory_space<vmem>>, vector<512x128xbf16>
    %cst_14 = arith.constant dense<0.000000e+00> : vector<8x128xf32>
    %18 = tpu.matmul %16, %17, %cst_14 {dimension_numbers = #tpu.dot_dimension_numbers<[1], [0], [0], [1], [0, 0, 1, 1], [], []>} : vector<8x512xbf16>, vector<512x128xbf16>, vector<8x128xf32> -> vector<8x128xf32>
    %c0_15 = arith.constant 0 : index
    %c0_16 = arith.constant 0 : index
    %19 = vector.load %arg7[%c0_15, %c0_16] : memref<1x128xf32, #tpu.memory_space<vmem>>, vector<1x128xf32>
    %20 = vector.broadcast %19 : vector<1x128xf32> to vector<8x128xf32>
    %21 = arith.addf %18, %20 : vector<8x128xf32>
    %c0_17 = arith.constant 0 : index
    %c0_18 = arith.constant 0 : index
    %22 = vector.load %arg8[%c0_17, %c0_18] : memref<8x128xf32, #tpu.memory_space<vmem>>, vector<8x128xf32>
    tpu.vector_store %arg8[%c0_17, %c0_18], %21 {strides = array<i32>} : memref<8x128xf32, #tpu.memory_space<vmem>>, vector<8x128xf32>,
    return
  }
  func.func @transform_0(%arg0: i32) -> (i32, i32) {
    %c0_i32 = arith.constant 0 : i32
    %c0_i32_0 = arith.constant 0 : i32
    return %arg0, %c0_i32 : i32, i32
  }
  func.func @transform_1(%arg0: i32) -> (i32, i32) {
    %c0_i32 = arith.constant 0 : i32
    %c0_i32_0 = arith.constant 0 : i32
    %c0_i32_1 = arith.constant 0 : i32
    return %c0_i32, %c0_i32_0 : i32, i32
  }
  func.func @transform_2(%arg0: i32) -> (i32, i32) {
    %c0_i32 = arith.constant 0 : i32
    %c0_i32_0 = arith.constant 0 : i32
    %c0_i32_1 = arith.constant 0 : i32
    return %c0_i32, %c0_i32_0 : i32, i32
  }
  func.func @transform_3(%arg0: i32) -> (i32, i32) {
    %c0_i32 = arith.constant 0 : i32
    %c0_i32_0 = arith.constant 0 : i32
    %c0_i32_1 = arith.constant 0 : i32
    return %c0_i32, %c0_i32_0 : i32, i32
  }
  func.func @transform_4(%arg0: i32) -> (i32, i32) {
    %c0_i32 = arith.constant 0 : i32
    %c0_i32_0 = arith.constant 0 : i32
    %c0_i32_1 = arith.constant 0 : i32
    return %c0_i32, %c0_i32_0 : i32, i32
  }
  func.func @transform_5(%arg0: i32) -> (i32, i32) {
    %c0_i32 = arith.constant 0 : i32
    %c0_i32_0 = arith.constant 0 : i32
    %c0_i32_1 = arith.constant 0 : i32
    return %c0_i32, %c0_i32_0 : i32, i32
  }
  func.func @transform_6(%arg0: i32) -> (i32, i32) {
    %c0_i32 = arith.constant 0 : i32
    %c0_i32_0 = arith.constant 0 : i32
    %c0_i32_1 = arith.constant 0 : i32
    return %c0_i32, %c0_i32_0 : i32, i32
  }
  func.func @transform_7(%arg0: i32) -> (i32, i32) {
    %c0_i32 = arith.constant 0 : i32
    %c0_i32_0 = arith.constant 0 : i32
    return %arg0, %c0_i32 : i32, i32
  }
}

</mosaic_0001>

<llo_original>
// kernel: tpu_custom_call.1
$region0: #{tpu_custom_call.1}
  #allocation0 [shape = 'u32[]', space=smem, size = 0x4, offset = 0x4, fixed_abs, tag = 'smem constant byte address 0x4 - core index']
  #allocation1 [shape = 'u32[144,128]{1,0:T(1,128)}', space=vmem, size = 0x12000, scoped, tag = 'internal scratch']
  %s0 = inlined_call_operand.hbm [shape: bf16[8,128], index: 0, kind: input, shape index: {}]
  %s1 = inlined_call_operand.hbm [shape: bf16[128,384], index: 1, kind: input, shape index: {}]
  %s2 = inlined_call_operand.vmem [shape: f32[1,384], index: 2, kind: input, shape index: {}]
  %s3 = inlined_call_operand.hbm [shape: bf16[384,512], index: 3, kind: input, shape index: {}]
  %s4 = inlined_call_operand.vmem [shape: f32[1,512], index: 4, kind: input, shape index: {}]
  %s5 = inlined_call_operand.hbm [shape: bf16[512,128], index: 5, kind: input, shape index: {}]
  %s6 = inlined_call_operand.vmem [shape: f32[1,128], index: 6, kind: input, shape index: {}]
  %s7 = inlined_call_operand.hbm [shape: f32[8,128], index: 7, kind: output, shape index: {}]
  %s8 = sld [smem:[#allocation0]]
  $region54: #{tpu_custom_call.1} parent=0
    _
  %s10 = ssub.s32 1, %s8
  %s11 = scalar_select 0, %s10, %s8
  $region1: #{tpu_custom_call.1} parent=0
    #allocation2 [shape = 'u8[2048]{0}', space=vmem, size = 0x800, scoped, tag = 'input window, operand 0, single buffered']
    #allocation3 [shape = 's32[1]{0}', space=sflag, size = 0x4, scoped, tag = 'scoped memory for tpu_custom_call.1']
    #allocation4 [shape = 's32[1]{0}', space=sflag, size = 0x4, scoped, tag = 'scoped memory for tpu_custom_call.1']
    #allocation5 [shape = 'u8[98304]{0}', space=vmem, size = 0x18000, scoped, tag = 'input window, operand 1, single buffered']
    #allocation6 [shape = 's32[1]{0}', space=sflag, size = 0x4, scoped, tag = 'scoped memory for tpu_custom_call.1']
    #allocation7 [shape = 'u8[393216]{0}', space=vmem, size = 0x60000, scoped, tag = 'input window, operand 3, single buffered']
    #allocation8 [shape = 'u8[131072]{0}', space=vmem, size = 0x20000, scoped, tag = 'input window, operand 5, single buffered']
    #allocation9 [shape = 's32[1]{0}', space=sflag, size = 0x4, scoped, tag = 'scoped memory for tpu_custom_call.1']
    #allocation10 [shape = 'u8[4096]{0}', space=vmem, size = 0x1000, scoped, tag = 'output window, operand 0, single buffered']
    %12 = vsyncpa [#allocation3], 0
    %13 = vsyncpa [#allocation6], 0
    %14 = vsyncpa [#allocation9], 0
    %15 = vsyncpa [#allocation4], 0
    // Predicated region
    $region2: #{tpu_custom_call.1} parent=1 // pred_check
      _
    $region3: #{tpu_custom_call.1} parent=1 // pred_check_branch
      %17 = sbr.rel (0) target = $region5
    $region4: #{tpu_custom_call.1} parent=1 // pred_region
      %s19 = ssub.s32 64, 64
      %20 = vsyncadd [#allocation3], %s19
      %s22 = sshll.u32 [#allocation2], 4
      %s23 = int_to_ptr.vmem [resolvable:$true] %s22
      %25 = dma.hbm_to_vmem [thread:$0]  %s0, 64, %s23, [#allocation3]
    $region5: #{tpu_custom_call.1} parent=1 // pred_fallthru
      _
    // Predicated region
    $region6: #{tpu_custom_call.1} parent=1 // pred_check
      _
    $region7: #{tpu_custom_call.1} parent=1 // pred_check_branch
      %27 = sbr.rel (0) target = $region9
    $region8: #{tpu_custom_call.1} parent=1 // pred_region
      %s29 = ssub.s32 3072, 3072
      %30 = vsyncadd [#allocation6], %s29
      %s31 = sshll.u32 [#allocation5], 4
      %s32 = int_to_ptr.vmem [resolvable:$true] %s31
      %37 = dma.hbm_to_vmem [thread:$0]  %s1, 3072, %s32, [#allocation6], 192, 192, 12
    $region9: #{tpu_custom_call.1} parent=1 // pred_fallthru
      _
    // Predicated region
    $region10: #{tpu_custom_call.1} parent=1 // pred_check
      _
    $region11: #{tpu_custom_call.1} parent=1 // pred_check_branch
      %39 = sbr.rel (0) target = $region13
    $region12: #{tpu_custom_call.1} parent=1 // pred_region
      _
    $region13: #{tpu_custom_call.1} parent=1 // pred_fallthru
      _
    // Predicated region
    $region14: #{tpu_custom_call.1} parent=1 // pred_check
      _
    $region15: #{tpu_custom_call.1} parent=1 // pred_check_branch
      %41 = sbr.rel (0) target = $region17
    $region16: #{tpu_custom_call.1} parent=1 // pred_region
      %s43 = ssub.s32 12288, 12288
      %44 = vsyncadd [#allocation6], %s43
      %s45 = sshll.u32 [#allocation7], 4
      %s46 = int_to_ptr.vmem [resolvable:$true] %s45
      %51 = dma.hbm_to_vmem [thread:$0]  %s3, 12288, %s46, [#allocation6], 256, 256, 16
    $region17: #{tpu_custom_call.1} parent=1 // pred_fallthru
      _
    // Predicated region
    $region18: #{tpu_custom_call.1} parent=1 // pred_check
      _
    $region19: #{tpu_custom_call.1} parent=1 // pred_check_branch
      %53 = sbr.rel (0) target = $region21
    $region20: #{tpu_custom_call.1} parent=1 // pred_region
      _
    $region21: #{tpu_custom_call.1} parent=1 // pred_fallthru
      _
    // Predicated region
    $region22: #{tpu_custom_call.1} parent=1 // pred_check
      _
    $region23: #{tpu_custom_call.1} parent=1 // pred_check_branch
      %55 = sbr.rel (0) target = $region25
    $region24: #{tpu_custom_call.1} parent=1 // pred_region
      %s57 = ssub.s32 4096, 4096
      %58 = vsyncadd [#allocation9], %s57
      %s59 = sshll.u32 [#allocation8], 4
      %s60 = int_to_ptr.vmem [resolvable:$true] %s59
      %65 = dma.hbm_to_vmem [thread:$0]  %s5, 4096, %s60, [#allocation9], 64, 64, 4
    $region25: #{tpu_custom_call.1} parent=1 // pred_fallthru
      _
    // Predicated region
    $region26: #{tpu_custom_call.1} parent=1 // pred_check
      _
    $region27: #{tpu_custom_call.1} parent=1 // pred_check_branch
      %67 = sbr.rel (0) target = $region29
    $region28: #{tpu_custom_call.1} parent=1 // pred_region
      _
    $region29: #{tpu_custom_call.1} parent=1 // pred_fallthru
      _
    // Predicated region
    $region30: #{tpu_custom_call.1} parent=1 // pred_check
      _
    $region31: #{tpu_custom_call.1} parent=1 // pred_check_branch
      %69 = sbr.rel (0) target = $region33
    $region32: #{tpu_custom_call.1} parent=1 // pred_region
      %70 = dma.done [#allocation3], 64
    $region33: #{tpu_custom_call.1} parent=1 // pred_fallthru
      _
    // Predicated region
    $region34: #{tpu_custom_call.1} parent=1 // pred_check
      _
    $region35: #{tpu_custom_call.1} parent=1 // pred_check_branch
      %72 = sbr.rel (0) target = $region37
    $region36: #{tpu_custom_call.1} parent=1 // pred_region
      %73 = dma.done [#allocation6], 3072
    $region37: #{tpu_custom_call.1} parent=1 // pred_fallthru
      _
    // Predicated region
    $region38: #{tpu_custom_call.1} parent=1 // pred_check
      _
    $region39: #{tpu_custom_call.1} parent=1 // pred_check_branch
      %75 = sbr.rel (0) target = $region41
    $region40: #{tpu_custom_call.1} parent=1 // pred_region
      %76 = dma.done [#allocation6], 12288
    $region41: #{tpu_custom_call.1} parent=1 // pred_fallthru
      _
    // Predicated region
    $region42: #{tpu_custom_call.1} parent=1 // pred_check
      _
    $region43: #{tpu_custom_call.1} parent=1 // pred_check_branch
      %78 = sbr.rel (0) target = $region45
    $region44: #{tpu_custom_call.1} parent=1 // pred_region
      %79 = dma.done [#allocation9], 4096
    $region45: #{tpu_custom_call.1} parent=1 // pred_fallthru
      _
    %v81 = vld [vmem:[#allocation2] sm:$0xf]
    %v82 = vld [vmem:[#allocation5] sm:$0xff]
    %v83 = vld [vmem:[#allocation5 + $0x8] sm:$0xf]
    %v84 = vld [vmem:[#allocation5 + $0xc] sm:$0xff]
    %v85 = vld [vmem:[#allocation5 + $0x14] sm:$0xf]
    %v86 = vld [vmem:[#allocation5 + $0x18] sm:$0xff]
    %v87 = vld [vmem:[#allocation5 + $0x20] sm:$0xf]
    %v88 = vld [vmem:[#allocation5 + $0x24] sm:$0xff]
    %v89 = vld [vmem:[#allocation5 + $0x2c] sm:$0xf]
    %v90 = vld [vmem:[#allocation5 + $0x30] sm:$0xff]
    %v91 = vld [vmem:[#allocation5 + $0x38] sm:$0xf]
    %v92 = vld [vmem:[#allocation5 + $0x3c] sm:$0xff]
    %v93 = vld [vmem:[#allocation5 + $0x44] sm:$0xf]
    %v94 = vld [vmem:[#allocation5 + $0x48] sm:$0xff]
    %v95 = vld [vmem:[#allocation5 + $0x50] sm:$0xf]
    %v96 = vld [vmem:[#allocation5 + $0x54] sm:$0xff]
    %v97 = vld [vmem:[#allocation5 + $0x5c] sm:$0xf]
    %v98 = vld [vmem:[#allocation5 + $0x60] sm:$0xff]
    %v99 = vld [vmem:[#allocation5 + $0x68] sm:$0xf]
    %v100 = vld [vmem:[#allocation5 + $0x6c] sm:$0xff]
    %v101 = vld [vmem:[#allocation5 + $0x74] sm:$0xf]
    %v102 = vld [vmem:[#allocation5 + $0x78] sm:$0xff]
    %v103 = vld [vmem:[#allocation5 + $0x80] sm:$0xf]
    %v104 = vld [vmem:[#allocation5 + $0x84] sm:$0xff]
    %v105 = vld [vmem:[#allocation5 + $0x8c] sm:$0xf]
    %v106 = vld [vmem:[#allocation5 + $0x90] sm:$0xff]
    %v107 = vld [vmem:[#allocation5 + $0x98] sm:$0xf]
    %v108 = vld [vmem:[#allocation5 + $0x9c] sm:$0xff]
    %v109 = vld [vmem:[#allocation5 + $0xa4] sm:$0xf]
    %v110 = vld [vmem:[#allocation5 + $0xa8] sm:$0xff]
    %v111 = vld [vmem:[#allocation5 + $0xb0] sm:$0xf]
    %v112 = vld [vmem:[#allocation5 + $0xb4] sm:$0xff]
    %v113 = vld [vmem:[#allocation5 + $0xbc] sm:$0xf]
    %v114 = vld [vmem:[%s2] sm:$0x7]
    %v116 = vlaneseq
    %v117 = vshrl.u32 %v116, 7
    %v118 = vsub.s32 0, %v117
    %v119 = vrot.slane %v114, %v118
    %v120 = vlaneseq
    %v121 = vshrl.u32 %v120, 7
    %v122 = vsub.s32 1, %v121
    %v123 = vrot.slane %v114, %v122
    %v124 = vlaneseq
    %v125 = vshrl.u32 %v124, 7
    %v126 = vsub.s32 2, %v125
    %v127 = vrot.slane %v114, %v126
    %v163 = vunpack.c.l.b16 %v82
    %v164 = vunpack.c.h.b16 %v82
    %v165 = vunpack.c.l.b16 %v83
    %v166 = vunpack.c.l.b16 %v84
    %v167 = vunpack.c.h.b16 %v84
    %v168 = vunpack.c.l.b16 %v85
    %v169 = vunpack.c.l.b16 %v86
    %v170 = vunpack.c.h.b16 %v86
    %v171 = vunpack.c.l.b16 %v87
    %v172 = vunpack.c.l.b16 %v88
    %v173 = vunpack.c.h.b16 %v88
    %v174 = vunpack.c.l.b16 %v89
    %v175 = vunpack.c.l.b16 %v90
    %v176 = vunpack.c.h.b16 %v90
    %v177 = vunpack.c.l.b16 %v91
    %v178 = vunpack.c.l.b16 %v92
    %v179 = vunpack.c.h.b16 %v92
    %v180 = vunpack.c.l.b16 %v93
    %v181 = vunpack.c.l.b16 %v94
    %v182 = vunpack.c.h.b16 %v94
    %v183 = vunpack.c.l.b16 %v95
    %v184 = vunpack.c.l.b16 %v96
    %v185 = vunpack.c.h.b16 %v96
    %v186 = vunpack.c.l.b16 %v97
    %v187 = vunpack.c.l.b16 %v98
    %v188 = vunpack.c.h.b16 %v98
    %v189 = vunpack.c.l.b16 %v99
    %v190 = vunpack.c.l.b16 %v100
    %v191 = vunpack.c.h.b16 %v100
    %v192 = vunpack.c.l.b16 %v101
    %v193 = vunpack.c.l.b16 %v102
    %v194 = vunpack.c.h.b16 %v102
    %v195 = vunpack.c.l.b16 %v103
    %v196 = vunpack.c.l.b16 %v104
    %v197 = vunpack.c.h.b16 %v104
    %v198 = vunpack.c.l.b16 %v105
    %v199 = vunpack.c.l.b16 %v106
    %v200 = vunpack.c.h.b16 %v106
    %v201 = vunpack.c.l.b16 %v107
    %v202 = vunpack.c.l.b16 %v108
    %v203 = vunpack.c.h.b16 %v108
    %v204 = vunpack.c.l.b16 %v109
    %v205 = vunpack.c.l.b16 %v110
    %v206 = vunpack.c.h.b16 %v110
    %v207 = vunpack.c.l.b16 %v111
    %v208 = vunpack.c.l.b16 %v112
    %v209 = vunpack.c.h.b16 %v112
    %v210 = vunpack.c.l.b16 %v113
    %v211 = vpack.c.b16 %v166, %v163
    %v212 = vpack.c.b16 %v167, %v164
    %v213 = vpack.c.b16 %v168, %v165
    %v214 = vpack.c.b16 %v172, %v169
    %v215 = vpack.c.b16 %v173, %v170
    %v216 = vpack.c.b16 %v174, %v171
    %v217 = vpack.c.b16 %v178, %v175
    %v218 = vpack.c.b16 %v179, %v176
    %v219 = vpack.c.b16 %v180, %v177
    %v220 = vpack.c.b16 %v184, %v181
    %v221 = vpack.c.b16 %v185, %v182
    %v222 = vpack.c.b16 %v186, %v183
    %v223 = vpack.c.b16 %v190, %v187
    %v224 = vpack.c.b16 %v191, %v188
    %v225 = vpack.c.b16 %v192, %v189
    %v226 = vpack.c.b16 %v196, %v193
    %v227 = vpack.c.b16 %v197, %v194
    %v228 = vpack.c.b16 %v198, %v195
    %v229 = vpack.c.b16 %v202, %v199
    %v230 = vpack.c.b16 %v203, %v200
    %v231 = vpack.c.b16 %v204, %v201
    %v232 = vpack.c.b16 %v208, %v205
    %v233 = vpack.c.b16 %v209, %v206
    %v234 = vpack.c.b16 %v210, %v207
    %259 = vmatprep.subr.bf16.mxu0 %v233
    %260 = vmatpush1.bf16.msra.mxu0 %v232
    %261 = vmatprep.subr.bf16.mxu0 %v230
    %262 = vmatpush1.bf16.msra.mxu0 %v229
    %263 = vmatprep.subr.bf16.mxu0 %v227
    %264 = vmatpush1.bf16.msra.mxu0 %v226
    %265 = vmatprep.subr.bf16.mxu0 %v224
    %266 = vmatpush1.bf16.msra.mxu0 %v223
    %267 = vmatprep.subr.bf16.mxu0 %v221
    %268 = vmatpush1.bf16.msra.mxu0 %v220
    %269 = vmatprep.subr.bf16.mxu0 %v218
    %270 = vmatpush1.bf16.msra.mxu0 %v217
    %271 = vmatprep.subr.bf16.mxu0 %v215
    %272 = vmatpush1.bf16.msra.mxu0 %v214
    %273 = vmatprep.subr.bf16.mxu0 %v212
    %274 = vmatpush1.bf16.msra.mxu0 %v211
    %275 = vmatprep.subr.bf16.mxu0 0
    %276 = vmatpush2.bf16.msra.mxu0 0
    %277 = vmatprep.subr.bf16.mxu0 0
    %278 = vmatpush2.bf16.msra.mxu0 0
    %279 = vmatprep.subr.bf16.mxu0 0
    %280 = vmatpush2.bf16.msra.mxu0 0
    %281 = vmatprep.subr.bf16.mxu0 0
    %282 = vmatpush2.bf16.msra.mxu0 0
    %283 = vmatprep.subr.bf16.mxu0 0
    %284 = vmatpush2.bf16.msra.mxu0 0
    %285 = vmatprep.subr.bf16.mxu0 0
    %286 = vmatpush2.bf16.msra.mxu0 0
    %287 = vmatprep.subr.bf16.mxu0 0
    %288 = vmatpush2.bf16.msra.mxu0 0
    %289 = vmatprep.subr.bf16.mxu0 0
    %290 = vmatpush2.bf16.msra.mxu0 0
    %291 = vmatprep.mubr.bf16.mxu0 0
    %292 = vmatmul.mubr.bf16.gmra.mxu0 %v81
    %v293 = vpop.f32.mrf.mxu0
    %v294 = vadd.f32 %v119, %v293
    %v295 = vpop.f32.mrf.mxu0
    %v296 = vadd.f32 %v123, %v295
    %v297 = vpop.f32.mrf.mxu0
    %v298 = vpop.f32.mrf.mxu0
    %299 = vdwg.mxu0
    %300 = vmatprep.subr.bf16.mxu0 0
    %301 = vmatpush1.bf16.msra.mxu0 %v234
    %302 = vmatprep.subr.bf16.mxu0 0
    %303 = vmatpush1.bf16.msra.mxu0 %v231
    %304 = vmatprep.subr.bf16.mxu0 0
    %305 = vmatpush1.bf16.msra.mxu0 %v228
    %306 = vmatprep.subr.bf16.mxu0 0
    %307 = vmatpush1.bf16.msra.mxu0 %v225
    %308 = vmatprep.subr.bf16.mxu0 0
    %309 = vmatpush1.bf16.msra.mxu0 %v222
    %310 = vmatprep.subr.bf16.mxu0 0
    %311 = vmatpush1.bf16.msra.mxu0 %v219
    %312 = vmatprep.subr.bf16.mxu0 0
    %313 = vmatpush1.bf16.msra.mxu0 %v216
    %314 = vmatprep.subr.bf16.mxu0 0
    %315 = vmatpush1.bf16.msra.mxu0 %v213
    %316 = vmatprep.subr.bf16.mxu0 0
    %317 = vmatpush2.bf16.msra.mxu0 0
    %318 = vmatprep.subr.bf16.mxu0 0
    %319 = vmatpush2.bf16.msra.mxu0 0
    %320 = vmatprep.subr.bf16.mxu0 0
    %321 = vmatpush2.bf16.msra.mxu0 0
    %322 = vmatprep.subr.bf16.mxu0 0
    %323 = vmatpush2.bf16.msra.mxu0 0
    %324 = vmatprep.subr.bf16.mxu0 0
    %325 = vmatpush2.bf16.msra.mxu0 0
    %326 = vmatprep.subr.bf16.mxu0 0
    %327 = vmatpush2.bf16.msra.mxu0 0
    %328 = vmatprep.subr.bf16.mxu0 0
    %329 = vmatpush2.bf16.msra.mxu0 0
    %330 = vmatprep.subr.bf16.mxu0 0
    %331 = vmatpush2.bf16.msra.mxu0 0
    %332 = vmatprep.mubr.bf16.mxu0 0
    %333 = vmatmul.mubr.bf16.gmra.mxu0 %v81
    %v334 = vpop.f32.mrf.mxu0
    %v335 = vadd.f32 %v127, %v334
    %v336 = vpop.f32.mrf.mxu0
    %v337 = vpop.f32.mrf.mxu0
    %v338 = vpop.f32.mrf.mxu0
    %339 = vdwg.mxu0
    %v340 = vmax.f32 %v294, 0.0
    %v341 = vmax.f32 %v296, 0.0
    %v342 = vmax.f32 %v335, 0.0
    %v343 = vpack.c.bf16 %v340, %v340
    %v344 = vpack.c.bf16 %v341, %v341
    %v345 = vpack.c.bf16 %v342, %v342
    %v346 = vld [vmem:[#allocation7] sm:$0xff]
    %v347 = vld [vmem:[#allocation7 + $0x8] sm:$0xff]
    %v348 = vld [vmem:[#allocation7 + $0x10] sm:$0xff]
    %v349 = vld [vmem:[#allocation7 + $0x18] sm:$0xff]
    %v350 = vld [vmem:[#allocation7 + $0x20] sm:$0xff]
    %v351 = vld [vmem:[#allocation7 + $0x28] sm:$0xff]
    %v352 = vld [vmem:[#allocation7 + $0x30] sm:$0xff]
    %v353 = vld [vmem:[#allocation7 + $0x38] sm:$0xff]
    %v354 = vld [vmem:[#allocation7 + $0x40] sm:$0xff]
    %v355 = vld [vmem:[#allocation7 + $0x48] sm:$0xff]
    %v356 = vld [vmem:[#allocation7 + $0x50] sm:$0xff]
    %v357 = vld [vmem:[#allocation7 + $0x58] sm:$0xff]
    %v358 = vld [vmem:[#allocation7 + $0x60] sm:$0xff]
    %v359 = vld [vmem:[#allocation7 + $0x68] sm:$0xff]
    %v360 = vld [vmem:[#allocation7 + $0x70] sm:$0xff]
    %v361 = vld [vmem:[#allocation7 + $0x78] sm:$0xff]
    %v362 = vld [vmem:[#allocation7 + $0x80] sm:$0xff]
    %v363 = vld [vmem:[#allocation7 + $0x88] sm:$0xff]
    %v364 = vld [vmem:[#allocation7 + $0x90] sm:$0xff]
    %v365 = vld [vmem:[#allocation7 + $0x98] sm:$0xff]
    %v366 = vld [vmem:[#allocation7 + $0xa0] sm:$0xff]
    %v367 = vld [vmem:[#allocation7 + $0xa8] sm:$0xff]
    %v368 = vld [vmem:[#allocation7 + $0xb0] sm:$0xff]
    %v369 = vld [vmem:[#allocation7 + $0xb8] sm:$0xff]
    %v370 = vld [vmem:[#allocation7 + $0xc0] sm:$0xff]
    %v371 = vld [vmem:[#allocation7 + $0xc8] sm:$0xff]
    %v372 = vld [vmem:[#allocation7 + $0xd0] sm:$0xff]
    %v373 = vld [vmem:[#allocation7 + $0xd8] sm:$0xff]
    %v374 = vld [vmem:[#allocation7 + $0xe0] sm:$0xff]
    %v375 = vld [vmem:[#allocation7 + $0xe8] sm:$0xff]
    %v376 = vld [vmem:[#allocation7 + $0xf0] sm:$0xff]
    %v377 = vld [vmem:[#allocation7 + $0xf8] sm:$0xff]
    %v378 = vld [vmem:[#allocation7 + $0x100] sm:$0xff]
    %v379 = vld [vmem:[#allocation7 + $0x108] sm:$0xff]
    %v380 = vld [vmem:[#allocation7 + $0x110] sm:$0xff]
    %v381 = vld [vmem:[#allocation7 + $0x118] sm:$0xff]
    %v382 = vld [vmem:[#allocation7 + $0x120] sm:$0xff]
    %v383 = vld [vmem:[#allocation7 + $0x128] sm:$0xff]
    %v384 = vld [vmem:[#allocation7 + $0x130] sm:$0xff]
    %v385 = vld [vmem:[#allocation7 + $0x138] sm:$0xff]
    %v386 = vld [vmem:[#allocation7 + $0x140] sm:$0xff]
    %v387 = vld [vmem:[#allocation7 + $0x148] sm:$0xff]
    %v388 = vld [vmem:[#allocation7 + $0x150] sm:$0xff]
    %v389 = vld [vmem:[#allocation7 + $0x158] sm:$0xff]
    %v390 = vld [vmem:[#allocation7 + $0x160] sm:$0xff]
    %v391 = vld [vmem:[#allocation7 + $0x168] sm:$0xff]
    %v392 = vld [vmem:[#allocation7 + $0x170] sm:$0xff]
    %v393 = vld [vmem:[#allocation7 + $0x178] sm:$0xff]
    %v394 = vld [vmem:[#allocation7 + $0x180] sm:$0xff]
    %v395 = vld [vmem:[#allocation7 + $0x188] sm:$0xff]
    %v396 = vld [vmem:[#allocation7 + $0x190] sm:$0xff]
    %v397 = vld [vmem:[#allocation7 + $0x198] sm:$0xff]
    %v398 = vld [vmem:[#allocation7 + $0x1a0] sm:$0xff]
    %v399 = vld [vmem:[#allocation7 + $0x1a8] sm:$0xff]
    %v400 = vld [vmem:[#allocation7 + $0x1b0] sm:$0xff]
    %v401 = vld [vmem:[#allocation7 + $0x1b8] sm:$0xff]
    %v402 = vld [vmem:[#allocation7 + $0x1c0] sm:$0xff]
    %v403 = vld [vmem:[#allocation7 + $0x1c8] sm:$0xff]
    %v404 = vld [vmem:[#allocation7 + $0x1d0] sm:$0xff]
    %v405 = vld [vmem:[#allocation7 + $0x1d8] sm:$0xff]
    %v406 = vld [vmem:[#allocation7 + $0x1e0] sm:$0xff]
    %v407 = vld [vmem:[#allocation7 + $0x1e8] sm:$0xff]
    %v408 = vld [vmem:[#allocation7 + $0x1f0] sm:$0xff]
    %v409 = vld [vmem:[#allocation7 + $0x1f8] sm:$0xff]
    %v410 = vld [vmem:[#allocation7 + $0x200] sm:$0xff]
    %v411 = vld [vmem:[#allocation7 + $0x208] sm:$0xff]
    %v412 = vld [vmem:[#allocation7 + $0x210] sm:$0xff]
    %v413 = vld [vmem:[#allocation7 + $0x218] sm:$0xff]
    %v414 = vld [vmem:[#allocation7 + $0x220] sm:$0xff]
    %v415 = vld [vmem:[#allocation7 + $0x228] sm:$0xff]
    %v416 = vld [vmem:[#allocation7 + $0x230] sm:$0xff]
    %v417 = vld [vmem:[#allocation7 + $0x238] sm:$0xff]
    %v418 = vld [vmem:[#allocation7 + $0x240] sm:$0xff]
    %v419 = vld [vmem:[#allocation7 + $0x248] sm:$0xff]
    %v420 = vld [vmem:[#allocation7 + $0x250] sm:$0xff]
    %v421 = vld [vmem:[#allocation7 + $0x258] sm:$0xff]
    %v422 = vld [vmem:[#allocation7 + $0x260] sm:$0xff]
    %v423 = vld [vmem:[#allocation7 + $0x268] sm:$0xff]
    %v424 = vld [vmem:[#allocation7 + $0x270] sm:$0xff]
    %v425 = vld [vmem:[#allocation7 + $0x278] sm:$0xff]
    %v426 = vld [vmem:[#allocation7 + $0x280] sm:$0xff]
    %v427 = vld [vmem:[#allocation7 + $0x288] sm:$0xff]
    %v428 = vld [vmem:[#allocation7 + $0x290] sm:$0xff]
    %v429 = vld [vmem:[#allocation7 + $0x298] sm:$0xff]
    %v430 = vld [vmem:[#allocation7 + $0x2a0] sm:$0xff]
    %v431 = vld [vmem:[#allocation7 + $0x2a8] sm:$0xff]
    %v432 = vld [vmem:[#allocation7 + $0x2b0] sm:$0xff]
    %v433 = vld [vmem:[#allocation7 + $0x2b8] sm:$0xff]
    %v434 = vld [vmem:[#allocation7 + $0x2c0] sm:$0xff]
    %v435 = vld [vmem:[#allocation7 + $0x2c8] sm:$0xff]
    %v436 = vld [vmem:[#allocation7 + $0x2d0] sm:$0xff]
    %v437 = vld [vmem:[#allocation7 + $0x2d8] sm:$0xff]
    %v438 = vld [vmem:[#allocation7 + $0x2e0] sm:$0xff]
    %v439 = vld [vmem:[#allocation7 + $0x2e8] sm:$0xff]
    %v440 = vld [vmem:[#allocation7 + $0x2f0] sm:$0xff]
    %v441 = vld [vmem:[#allocation7 + $0x2f8] sm:$0xff]
    %v442 = vld [vmem:[%s4] sm:$0xf]
    %v444 = vlaneseq
    %v445 = vshrl.u32 %v444, 7
    %v446 = vsub.s32 0, %v445
    %v447 = vrot.slane %v442, %v446
    %v448 = vlaneseq
    %v449 = vshrl.u32 %v448, 7
    %v450 = vsub.s32 1, %v449
    %v451 = vrot.slane %v442, %v450
    %v452 = vlaneseq
    %v453 = vshrl.u32 %v452, 7
    %v454 = vsub.s32 2, %v453
    %v455 = vrot.slane %v442, %v454
    %v456 = vlaneseq
    %v457 = vshrl.u32 %v456, 7
    %v458 = vsub.s32 3, %v457
    %v459 = vrot.slane %v442, %v458
    %v560 = vunpack.c.l.b16 %v346
    %v561 = vunpack.c.h.b16 %v346
    %v562 = vunpack.c.l.b16 %v347
    %v563 = vunpack.c.h.b16 %v347
    %v564 = vunpack.c.l.b16 %v348
    %v565 = vunpack.c.h.b16 %v348
    %v566 = vunpack.c.l.b16 %v349
    %v567 = vunpack.c.h.b16 %v349
    %v568 = vunpack.c.l.b16 %v350
    %v569 = vunpack.c.h.b16 %v350
    %v570 = vunpack.c.l.b16 %v351
    %v571 = vunpack.c.h.b16 %v351
    %v572 = vunpack.c.l.b16 %v352
    %v573 = vunpack.c.h.b16 %v352
    %v574 = vunpack.c.l.b16 %v353
    %v575 = vunpack.c.h.b16 %v353
    %v576 = vunpack.c.l.b16 %v354
    %v577 = vunpack.c.h.b16 %v354
    %v578 = vunpack.c.l.b16 %v355
    %v579 = vunpack.c.h.b16 %v355
    %v580 = vunpack.c.l.b16 %v356
    %v581 = vunpack.c.h.b16 %v356
    %v582 = vunpack.c.l.b16 %v357
    %v583 = vunpack.c.h.b16 %v357
    %v584 = vunpack.c.l.b16 %v358
    %v585 = vunpack.c.h.b16 %v358
    %v586 = vunpack.c.l.b16 %v359
    %v587 = vunpack.c.h.b16 %v359
    %v588 = vunpack.c.l.b16 %v360
    %v589 = vunpack.c.h.b16 %v360
    %v590 = vunpack.c.l.b16 %v361
    %v591 = vunpack.c.h.b16 %v361
    %v592 = vunpack.c.l.b16 %v362
    %v593 = vunpack.c.h.b16 %v362
    %v594 = vunpack.c.l.b16 %v363
    %v595 = vunpack.c.h.b16 %v363
    %v596 = vunpack.c.l.b16 %v364
    %v597 = vunpack.c.h.b16 %v364
    %v598 = vunpack.c.l.b16 %v365
    %v599 = vunpack.c.h.b16 %v365
    %v600 = vunpack.c.l.b16 %v366
    %v601 = vunpack.c.h.b16 %v366
    %v602 = vunpack.c.l.b16 %v367
    %v603 = vunpack.c.h.b16 %v367
    %v604 = vunpack.c.l.b16 %v368
    %v605 = vunpack.c.h.b16 %v368
    %v606 = vunpack.c.l.b16 %v369
    %v607 = vunpack.c.h.b16 %v369
    %v608 = vunpack.c.l.b16 %v370
    %v609 = vunpack.c.h.b16 %v370
    %v610 = vunpack.c.l.b16 %v371
    %v611 = vunpack.c.h.b16 %v371
    %v612 = vunpack.c.l.b16 %v372
    %v613 = vunpack.c.h.b16 %v372
    %v614 = vunpack.c.l.b16 %v373
    %v615 = vunpack.c.h.b16 %v373
    %v616 = vunpack.c.l.b16 %v374
    %v617 = vunpack.c.h.b16 %v374
    %v618 = vunpack.c.l.b16 %v375
    %v619 = vunpack.c.h.b16 %v375
    %v620 = vunpack.c.l.b16 %v376
    %v621 = vunpack.c.h.b16 %v376
    %v622 = vunpack.c.l.b16 %v377
    %v623 = vunpack.c.h.b16 %v377
    %v624 = vunpack.c.l.b16 %v378
    %v625 = vunpack.c.h.b16 %v378
    %v626 = vunpack.c.l.b16 %v379
    %v627 = vunpack.c.h.b16 %v379
    %v628 = vunpack.c.l.b16 %v380
    %v629 = vunpack.c.h.b16 %v380
    %v630 = vunpack.c.l.b16 %v381
    %v631 = vunpack.c.h.b16 %v381
    %v632 = vunpack.c.l.b16 %v382
    %v633 = vunpack.c.h.b16 %v382
    %v634 = vunpack.c.l.b16 %v383
    %v635 = vunpack.c.h.b16 %v383
    %v636 = vunpack.c.l.b16 %v384
    %v637 = vunpack.c.h.b16 %v384
    %v638 = vunpack.c.l.b16 %v385
    %v639 = vunpack.c.h.b16 %v385
    %v640 = vunpack.c.l.b16 %v386
    %v641 = vunpack.c.h.b16 %v386
    %v642 = vunpack.c.l.b16 %v387
    %v643 = vunpack.c.h.b16 %v387
    %v644 = vunpack.c.l.b16 %v388
    %v645 = vunpack.c.h.b16 %v388
    %v646 = vunpack.c.l.b16 %v389
    %v647 = vunpack.c.h.b16 %v389
    %v648 = vunpack.c.l.b16 %v390
    %v649 = vunpack.c.h.b16 %v390
    %v650 = vunpack.c.l.b16 %v391
    %v651 = vunpack.c.h.b16 %v391
    %v652 = vunpack.c.l.b16 %v392
    %v653 = vunpack.c.h.b16 %v392
    %v654 = vunpack.c.l.b16 %v393
    %v655 = vunpack.c.h.b16 %v393
    %v656 = vunpack.c.l.b16 %v394
    %v657 = vunpack.c.h.b16 %v394
    %v658 = vunpack.c.l.b16 %v395
    %v659 = vunpack.c.h.b16 %v395
    %v660 = vunpack.c.l.b16 %v396
    %v661 = vunpack.c.h.b16 %v396
    %v662 = vunpack.c.l.b16 %v397
    %v663 = vunpack.c.h.b16 %v397
    %v664 = vunpack.c.l.b16 %v398
    %v665 = vunpack.c.h.b16 %v398
    %v666 = vunpack.c.l.b16 %v399
    %v667 = vunpack.c.h.b16 %v399
    %v668 = vunpack.c.l.b16 %v400
    %v669 = vunpack.c.h.b16 %v400
    %v670 = vunpack.c.l.b16 %v401
    %v671 = vunpack.c.h.b16 %v401
    %v672 = vunpack.c.l.b16 %v402
    %v673 = vunpack.c.h.b16 %v402
    %v674 = vunpack.c.l.b16 %v403
    %v675 = vunpack.c.h.b16 %v403
    %v676 = vunpack.c.l.b16 %v404
    %v677 = vunpack.c.h.b16 %v404
    %v678 = vunpack.c.l.b16 %v405
    %v679 = vunpack.c.h.b16 %v405
    %v680 = vunpack.c.l.b16 %v406
    %v681 = vunpack.c.h.b16 %v406
    %v682 = vunpack.c.l.b16 %v407
    %v683 = vunpack.c.h.b16 %v407
    %v684 = vunpack.c.l.b16 %v408
    %v685 = vunpack.c.h.b16 %v408
    %v686 = vunpack.c.l.b16 %v409
    %v687 = vunpack.c.h.b16 %v409
    %v688 = vunpack.c.l.b16 %v410
    %v689 = vunpack.c.h.b16 %v410
    %v690 = vunpack.c.l.b16 %v411
    %v691 = vunpack.c.h.b16 %v411
    %v692 = vunpack.c.l.b16 %v412
    %v693 = vunpack.c.h.b16 %v412
    %v694 = vunpack.c.l.b16 %v413
    %v695 = vunpack.c.h.b16 %v413
    %v696 = vunpack.c.l.b16 %v414
    %v697 = vunpack.c.h.b16 %v414
    %v698 = vunpack.c.l.b16 %v415
    %v699 = vunpack.c.h.b16 %v415
    %v700 = vunpack.c.l.b16 %v416
    %v701 = vunpack.c.h.b16 %v416
    %v702 = vunpack.c.l.b16 %v417
    %v703 = vunpack.c.h.b16 %v417
    %v704 = vunpack.c.l.b16 %v418
    %v705 = vunpack.c.h.b16 %v418
    %v706 = vunpack.c.l.b16 %v419
    %v707 = vunpack.c.h.b16 %v419
    %v708 = vunpack.c.l.b16 %v420
    %v709 = vunpack.c.h.b16 %v420
    %v710 = vunpack.c.l.b16 %v421
    %v711 = vunpack.c.h.b16 %v421
    %v712 = vunpack.c.l.b16 %v422
    %v713 = vunpack.c.h.b16 %v422
    %v714 = vunpack.c.l.b16 %v423
    %v715 = vunpack.c.h.b16 %v423
    %v716 = vunpack.c.l.b16 %v424
    %v717 = vunpack.c.h.b16 %v424
    %v718 = vunpack.c.l.b16 %v425
    %v719 = vunpack.c.h.b16 %v425
    %v720 = vunpack.c.l.b16 %v426
    %v721 = vunpack.c.h.b16 %v426
    %v722 = vunpack.c.l.b16 %v427
    %v723 = vunpack.c.h.b16 %v427
    %v724 = vunpack.c.l.b16 %v428
    %v725 = vunpack.c.h.b16 %v428
    %v726 = vunpack.c.l.b16 %v429
    %v727 = vunpack.c.h.b16 %v429
    %v728 = vunpack.c.l.b16 %v430
    %v729 = vunpack.c.h.b16 %v430
    %v730 = vunpack.c.l.b16 %v431
    %v731 = vunpack.c.h.b16 %v431
    %v732 = vunpack.c.l.b16 %v432
    %v733 = vunpack.c.h.b16 %v432
    %v734 = vunpack.c.l.b16 %v433
    %v735 = vunpack.c.h.b16 %v433
    %v736 = vunpack.c.l.b16 %v434
    %v737 = vunpack.c.h.b16 %v434
    %v738 = vunpack.c.l.b16 %v435
    %v739 = vunpack.c.h.b16 %v435
    %v740 = vunpack.c.l.b16 %v436
    %v741 = vunpack.c.h.b16 %v436
    %v742 = vunpack.c.l.b16 %v437
    %v743 = vunpack.c.h.b16 %v437
    %v744 = vunpack.c.l.b16 %v438
    %v745 = vunpack.c.h.b16 %v438
    %v746 = vunpack.c.l.b16 %v439
    %v747 = vunpack.c.h.b16 %v439
    %v748 = vunpack.c.l.b16 %v440
    %v749 = vunpack.c.h.b16 %v440
    %v750 = vunpack.c.l.b16 %v441
    %v751 = vunpack.c.h.b16 %v441
    %v752 = vpack.c.b16 %v564, %v560
    %v753 = vpack.c.b16 %v565, %v561
    %v754 = vpack.c.b16 %v566, %v562
    %v755 = vpack.c.b16 %v567, %v563
    %v756 = vpack.c.b16 %v572, %v568
    %v757 = vpack.c.b16 %v573, %v569
    %v758 = vpack.c.b16 %v574, %v570
    %v759 = vpack.c.b16 %v575, %v571
    %v760 = vpack.c.b16 %v580, %v576
    %v761 = vpack.c.b16 %v581, %v577
    %v762 = vpack.c.b16 %v582, %v578
    %v763 = vpack.c.b16 %v583, %v579
    %v764 = vpack.c.b16 %v588, %v584
    %v765 = vpack.c.b16 %v589, %v585
    %v766 = vpack.c.b16 %v590, %v586
    %v767 = vpack.c.b16 %v591, %v587
    %v768 = vpack.c.b16 %v596, %v592
    %v769 = vpack.c.b16 %v597, %v593
    %v770 = vpack.c.b16 %v598, %v594
    %v771 = vpack.c.b16 %v599, %v595
    %v772 = vpack.c.b16 %v604, %v600
    %v773 = vpack.c.b16 %v605, %v601
    %v774 = vpack.c.b16 %v606, %v602
    %v775 = vpack.c.b16 %v607, %v603
    %v776 = vpack.c.b16 %v612, %v608
    %v777 = vpack.c.b16 %v613, %v609
    %v778 = vpack.c.b16 %v614, %v610
    %v779 = vpack.c.b16 %v615, %v611
    %v780 = vpack.c.b16 %v620, %v616
    %v781 = vpack.c.b16 %v621, %v617
    %v782 = vpack.c.b16 %v622, %v618
    %v783 = vpack.c.b16 %v623, %v619
    %v784 = vpack.c.b16 %v628, %v624
    %v785 = vpack.c.b16 %v629, %v625
    %v786 = vpack.c.b16 %v630, %v626
    %v787 = vpack.c.b16 %v631, %v627
    %v788 = vpack.c.b16 %v636, %v632
    %v789 = vpack.c.b16 %v637, %v633
    %v790 = vpack.c.b16 %v638, %v634
    %v791 = vpack.c.b16 %v639, %v635
    %v792 = vpack.c.b16 %v644, %v640
    %v793 = vpack.c.b16 %v645, %v641
    %v794 = vpack.c.b16 %v646, %v642
    %v795 = vpack.c.b16 %v647, %v643
    %v796 = vpack.c.b16 %v652, %v648
    %v797 = vpack.c.b16 %v653, %v649
    %v798 = vpack.c.b16 %v654, %v650
    %v799 = vpack.c.b16 %v655, %v651
    %v800 = vpack.c.b16 %v660, %v656
    %v801 = vpack.c.b16 %v661, %v657
    %v802 = vpack.c.b16 %v662, %v658
    %v803 = vpack.c.b16 %v663, %v659
    %v804 = vpack.c.b16 %v668, %v664
    %v805 = vpack.c.b16 %v669, %v665
    %v806 = vpack.c.b16 %v670, %v666
    %v807 = vpack.c.b16 %v671, %v667
    %v808 = vpack.c.b16 %v676, %v672
    %v809 = vpack.c.b16 %v677, %v673
    %v810 = vpack.c.b16 %v678, %v674
    %v811 = vpack.c.b16 %v679, %v675
    %v812 = vpack.c.b16 %v684, %v680
    %v813 = vpack.c.b16 %v685, %v681
    %v814 = vpack.c.b16 %v686, %v682
    %v815 = vpack.c.b16 %v687, %v683
    %v816 = vpack.c.b16 %v692, %v688
    %v817 = vpack.c.b16 %v693, %v689
    %v818 = vpack.c.b16 %v694, %v690
    %v819 = vpack.c.b16 %v695, %v691
    %v820 = vpack.c.b16 %v700, %v696
    %v821 = vpack.c.b16 %v701, %v697
    %v822 = vpack.c.b16 %v702, %v698
    %v823 = vpack.c.b16 %v703, %v699
    %v824 = vpack.c.b16 %v708, %v704
    %v825 = vpack.c.b16 %v709, %v705
    %v826 = vpack.c.b16 %v710, %v706
    %v827 = vpack.c.b16 %v711, %v707
    %v828 = vpack.c.b16 %v716, %v712
    %v829 = vpack.c.b16 %v717, %v713
    %v830 = vpack.c.b16 %v718, %v714
    %v831 = vpack.c.b16 %v719, %v715
    %v832 = vpack.c.b16 %v724, %v720
    %v833 = vpack.c.b16 %v725, %v721
    %v834 = vpack.c.b16 %v726, %v722
    %v835 = vpack.c.b16 %v727, %v723
    %v836 = vpack.c.b16 %v732, %v728
    %v837 = vpack.c.b16 %v733, %v729
    %v838 = vpack.c.b16 %v734, %v730
    %v839 = vpack.c.b16 %v735, %v731
    %v840 = vpack.c.b16 %v740, %v736
    %v841 = vpack.c.b16 %v741, %v737
    %v842 = vpack.c.b16 %v742, %v738
    %v843 = vpack.c.b16 %v743, %v739
    %v844 = vpack.c.b16 %v748, %v744
    %v845 = vpack.c.b16 %v749, %v745
    %v846 = vpack.c.b16 %v750, %v746
    %v847 = vpack.c.b16 %v751, %v747
    %944 = vmatprep.subr.bf16.mxu0 %v781
    %945 = vmatpush1.bf16.msra.mxu0 %v780
    %946 = vmatprep.subr.bf16.mxu0 %v777
    %947 = vmatpush1.bf16.msra.mxu0 %v776
    %948 = vmatprep.subr.bf16.mxu0 %v773
    %949 = vmatpush1.bf16.msra.mxu0 %v772
    %950 = vmatprep.subr.bf16.mxu0 %v769
    %951 = vmatpush1.bf16.msra.mxu0 %v768
    %952 = vmatprep.subr.bf16.mxu0 %v765
    %953 = vmatpush1.bf16.msra.mxu0 %v764
    %954 = vmatprep.subr.bf16.mxu0 %v761
    %955 = vmatpush1.bf16.msra.mxu0 %v760
    %956 = vmatprep.subr.bf16.mxu0 %v757
    %957 = vmatpush1.bf16.msra.mxu0 %v756
    %958 = vmatprep.subr.bf16.mxu0 %v753
    %959 = vmatpush1.bf16.msra.mxu0 %v752
    %960 = vmatprep.subr.bf16.mxu0 %v813
    %961 = vmatpush2.bf16.msra.mxu0 %v812
    %962 = vmatprep.subr.bf16.mxu0 %v809
    %963 = vmatpush2.bf16.msra.mxu0 %v808
    %964 = vmatprep.subr.bf16.mxu0 %v805
    %965 = vmatpush2.bf16.msra.mxu0 %v804
    %966 = vmatprep.subr.bf16.mxu0 %v801
    %967 = vmatpush2.bf16.msra.mxu0 %v800
    %968 = vmatprep.subr.bf16.mxu0 %v797
    %969 = vmatpush2.bf16.msra.mxu0 %v796
    %970 = vmatprep.subr.bf16.mxu0 %v793
    %971 = vmatpush2.bf16.msra.mxu0 %v792
    %972 = vmatprep.subr.bf16.mxu0 %v789
    %973 = vmatpush2.bf16.msra.mxu0 %v788
    %974 = vmatprep.subr.bf16.mxu0 %v785
    %975 = vmatpush2.bf16.msra.mxu0 %v784
    %976 = vmatprep.mubr.bf16.mxu0 %v344
    %977 = vmatmul.mubr.bf16.gmra.mxu0 %v343
    %v978 = vpop.f32.mrf.mxu0
    %v979 = vadd.f32 %v447, %v978
    %v980 = vpop.f32.mrf.mxu0
    %v981 = vadd.f32 %v451, %v980
    %v982 = vpop.f32.mrf.mxu0
    %v983 = vpop.f32.mrf.mxu0
    %984 = vdwg.mxu0
    %985 = vmatprep.subr.bf16.mxu0 %v845
    %986 = vmatpush1.bf16.msra.mxu0 %v844
    %987 = vmatprep.subr.bf16.mxu0 %v841
    %988 = vmatpush1.bf16.msra.mxu0 %v840
    %989 = vmatprep.subr.bf16.mxu0 %v837
    %990 = vmatpush1.bf16.msra.mxu0 %v836
    %991 = vmatprep.subr.bf16.mxu0 %v833
    %992 = vmatpush1.bf16.msra.mxu0 %v832
    %993 = vmatprep.subr.bf16.mxu0 %v829
    %994 = vmatpush1.bf16.msra.mxu0 %v828
    %995 = vmatprep.subr.bf16.mxu0 %v825
    %996 = vmatpush1.bf16.msra.mxu0 %v824
    %997 = vmatprep.subr.bf16.mxu0 %v821
    %998 = vmatpush1.bf16.msra.mxu0 %v820
    %999 = vmatprep.subr.bf16.mxu0 %v817
    %1000 = vmatpush1.bf16.msra.mxu0 %v816
    %1001 = vmatprep.subr.bf16.mxu0 0
    %1002 = vmatpush2.bf16.msra.mxu0 0
    %1003 = vmatprep.subr.bf16.mxu0 0
    %1004 = vmatpush2.bf16.msra.mxu0 0
    %1005 = vmatprep.subr.bf16.mxu0 0
    %1006 = vmatpush2.bf16.msra.mxu0 0
    %1007 = vmatprep.subr.bf16.mxu0 0
    %1008 = vmatpush2.bf16.msra.mxu0 0
    %1009 = vmatprep.subr.bf16.mxu0 0
    %1010 = vmatpush2.bf16.msra.mxu0 0
    %1011 = vmatprep.subr.bf16.mxu0 0
    %1012 = vmatpush2.bf16.msra.mxu0 0
    %1013 = vmatprep.subr.bf16.mxu0 0
    %1014 = vmatpush2.bf16.msra.mxu0 0
    %1015 = vmatprep.subr.bf16.mxu0 0
    %1016 = vmatpush2.bf16.msra.mxu0 0
    %1017 = vmatprep.mubr.bf16.mxu0 0
    %1018 = vmatmul.mubr.bf16.gmra.mxu0 %v345
    %v1019 = vpop.f32.mrf.mxu0
    %v1020 = vadd.f32 %v979, %v1019
    %v1021 = vpop.f32.mrf.mxu0
    %v1022 = vadd.f32 %v981, %v1021
    %v1023 = vpop.f32.mrf.mxu0
    %v1024 = vpop.f32.mrf.mxu0
    %1025 = vdwg.mxu0
    %1026 = vmatprep.subr.bf16.mxu0 %v783
    %1027 = vmatpush1.bf16.msra.mxu0 %v782
    %1028 = vmatprep.subr.bf16.mxu0 %v779
    %1029 = vmatpush1.bf16.msra.mxu0 %v778
    %1030 = vmatprep.subr.bf16.mxu0 %v775
    %1031 = vmatpush1.bf16.msra.mxu0 %v774
    %1032 = vmatprep.subr.bf16.mxu0 %v771
    %1033 = vmatpush1.bf16.msra.mxu0 %v770
    %1034 = vmatprep.subr.bf16.mxu0 %v767
    %1035 = vmatpush1.bf16.msra.mxu0 %v766
    %1036 = vmatprep.subr.bf16.mxu0 %v763
    %1037 = vmatpush1.bf16.msra.mxu0 %v762
    %1038 = vmatprep.subr.bf16.mxu0 %v759
    %1039 = vmatpush1.bf16.msra.mxu0 %v758
    %1040 = vmatprep.subr.bf16.mxu0 %v755
    %1041 = vmatpush1.bf16.msra.mxu0 %v754
    %1042 = vmatprep.subr.bf16.mxu0 %v815
    %1043 = vmatpush2.bf16.msra.mxu0 %v814
    %1044 = vmatprep.subr.bf16.mxu0 %v811
    %1045 = vmatpush2.bf16.msra.mxu0 %v810
    %1046 = vmatprep.subr.bf16.mxu0 %v807
    %1047 = vmatpush2.bf16.msra.mxu0 %v806
    %1048 = vmatprep.subr.bf16.mxu0 %v803
    %1049 = vmatpush2.bf16.msra.mxu0 %v802
    %1050 = vmatprep.subr.bf16.mxu0 %v799
    %1051 = vmatpush2.bf16.msra.mxu0 %v798
    %1052 = vmatprep.subr.bf16.mxu0 %v795
    %1053 = vmatpush2.bf16.msra.mxu0 %v794
    %1054 = vmatprep.subr.bf16.mxu0 %v791
    %1055 = vmatpush2.bf16.msra.mxu0 %v790
    %1056 = vmatprep.subr.bf16.mxu0 %v787
    %1057 = vmatpush2.bf16.msra.mxu0 %v786
    %1058 = vmatprep.mubr.bf16.mxu0 %v344
    %1059 = vmatmul.mubr.bf16.gmra.mxu0 %v343
    %v1060 = vpop.f32.mrf.mxu0
    %v1061 = vadd.f32 %v455, %v1060
    %v1062 = vpop.f32.mrf.mxu0
    %v1063 = vadd.f32 %v459, %v1062
    %v1064 = vpop.f32.mrf.mxu0
    %v1065 = vpop.f32.mrf.mxu0
    %1066 = vdwg.mxu0
    %1067 = vmatprep.subr.bf16.mxu0 %v847
    %1068 = vmatpush1.bf16.msra.mxu0 %v846
    %1069 = vmatprep.subr.bf16.mxu0 %v843
    %1070 = vmatpush1.bf16.msra.mxu0 %v842
    %1071 = vmatprep.subr.bf16.mxu0 %v839
    %1072 = vmatpush1.bf16.msra.mxu0 %v838
    %1073 = vmatprep.subr.bf16.mxu0 %v835
    %1074 = vmatpush1.bf16.msra.mxu0 %v834
    %1075 = vmatprep.subr.bf16.mxu0 %v831
    %1076 = vmatpush1.bf16.msra.mxu0 %v830
    %1077 = vmatprep.subr.bf16.mxu0 %v827
    %1078 = vmatpush1.bf16.msra.mxu0 %v826
    %1079 = vmatprep.subr.bf16.mxu0 %v823
    %1080 = vmatpush1.bf16.msra.mxu0 %v822
    %1081 = vmatprep.subr.bf16.mxu0 %v819
    %1082 = vmatpush1.bf16.msra.mxu0 %v818
    %1083 = vmatprep.subr.bf16.mxu0 0
    %1084 = vmatpush2.bf16.msra.mxu0 0
    %1085 = vmatprep.subr.bf16.mxu0 0
    %1086 = vmatpush2.bf16.msra.mxu0 0
    %1087 = vmatprep.subr.bf16.mxu0 0
    %1088 = vmatpush2.bf16.msra.mxu0 0
    %1089 = vmatprep.subr.bf16.mxu0 0
    %1090 = vmatpush2.bf16.msra.mxu0 0
    %1091 = vmatprep.subr.bf16.mxu0 0
    %1092 = vmatpush2.bf16.msra.mxu0 0
    %1093 = vmatprep.subr.bf16.mxu0 0
    %1094 = vmatpush2.bf16.msra.mxu0 0
    %1095 = vmatprep.subr.bf16.mxu0 0
    %1096 = vmatpush2.bf16.msra.mxu0 0
    %1097 = vmatprep.subr.bf16.mxu0 0
    %1098 = vmatpush2.bf16.msra.mxu0 0
    %1099 = vmatprep.mubr.bf16.mxu0 0
    %1100 = vmatmul.mubr.bf16.gmra.mxu0 %v345
    %v1101 = vpop.f32.mrf.mxu0
    %v1102 = vadd.f32 %v1061, %v1101
    %v1103 = vpop.f32.mrf.mxu0
    %v1104 = vadd.f32 %v1063, %v1103
    %v1105 = vpop.f32.mrf.mxu0
    %v1106 = vpop.f32.mrf.mxu0
    %1107 = vdwg.mxu0
    %v1108 = vmax.f32 %v1020, 0.0
    %v1109 = vmax.f32 %v1022, 0.0
    %v1110 = vmax.f32 %v1102, 0.0
    %v1111 = vmax.f32 %v1104, 0.0
    %v1112 = vpack.c.bf16 %v1108, %v1108
    %v1113 = vpack.c.bf16 %v1109, %v1109
    %v1114 = vpack.c.bf16 %v1110, %v1110
    %v1115 = vpack.c.bf16 %v1111, %v1111
    %v1116 = vld [vmem:[#allocation8] sm:$0xf]
    %v1117 = vld [vmem:[#allocation8 + $0x4] sm:$0xf]
    %v1118 = vld [vmem:[#allocation8 + $0x8] sm:$0xf]
    %v1119 = vld [vmem:[#allocation8 + $0xc] sm:$0xf]
    %v1120 = vld [vmem:[#allocation8 + $0x10] sm:$0xf]
    %v1121 = vld [vmem:[#allocation8 + $0x14] sm:$0xf]
    %v1122 = vld [vmem:[#allocation8 + $0x18] sm:$0xf]
    %v1123 = vld [vmem:[#allocation8 + $0x1c] sm:$0xf]
    %v1124 = vld [vmem:[#allocation8 + $0x20] sm:$0xf]
    %v1125 = vld [vmem:[#allocation8 + $0x24] sm:$0xf]
    %v1126 = vld [vmem:[#allocation8 + $0x28] sm:$0xf]
    %v1127 = vld [vmem:[#allocation8 + $0x2c] sm:$0xf]
    %v1128 = vld [vmem:[#allocation8 + $0x30] sm:$0xf]
    %v1129 = vld [vmem:[#allocation8 + $0x34] sm:$0xf]
    %v1130 = vld [vmem:[#allocation8 + $0x38] sm:$0xf]
    %v1131 = vld [vmem:[#allocation8 + $0x3c] sm:$0xf]
    %v1132 = vld [vmem:[#allocation8 + $0x40] sm:$0xf]
    %v1133 = vld [vmem:[#allocation8 + $0x44] sm:$0xf]
    %v1134 = vld [vmem:[#allocation8 + $0x48] sm:$0xf]
    %v1135 = vld [vmem:[#allocation8 + $0x4c] sm:$0xf]
    %v1136 = vld [vmem:[#allocation8 + $0x50] sm:$0xf]
    %v1137 = vld [vmem:[#allocation8 + $0x54] sm:$0xf]
    %v1138 = vld [vmem:[#allocation8 + $0x58] sm:$0xf]
    %v1139 = vld [vmem:[#allocation8 + $0x5c] sm:$0xf]
    %v1140 = vld [vmem:[#allocation8 + $0x60] sm:$0xf]
    %v1141 = vld [vmem:[#allocation8 + $0x64] sm:$0xf]
    %v1142 = vld [vmem:[#allocation8 + $0x68] sm:$0xf]
    %v1143 = vld [vmem:[#allocation8 + $0x6c] sm:$0xf]
    %v1144 = vld [vmem:[#allocation8 + $0x70] sm:$0xf]
    %v1145 = vld [vmem:[#allocation8 + $0x74] sm:$0xf]
    %v1146 = vld [vmem:[#allocation8 + $0x78] sm:$0xf]
    %v1147 = vld [vmem:[#allocation8 + $0x7c] sm:$0xf]
    %v1148 = vld [vmem:[#allocation8 + $0x80] sm:$0xf]
    %v1149 = vld [vmem:[#allocation8 + $0x84] sm:$0xf]
    %v1150 = vld [vmem:[#allocation8 + $0x88] sm:$0xf]
    %v1151 = vld [vmem:[#allocation8 + $0x8c] sm:$0xf]
    %v1152 = vld [vmem:[#allocation8 + $0x90] sm:$0xf]
    %v1153 = vld [vmem:[#allocation8 + $0x94] sm:$0xf]
    %v1154 = vld [vmem:[#allocation8 + $0x98] sm:$0xf]
    %v1155 = vld [vmem:[#allocation8 + $0x9c] sm:$0xf]
    %v1156 = vld [vmem:[#allocation8 + $0xa0] sm:$0xf]
    %v1157 = vld [vmem:[#allocation8 + $0xa4] sm:$0xf]
    %v1158 = vld [vmem:[#allocation8 + $0xa8] sm:$0xf]
    %v1159 = vld [vmem:[#allocation8 + $0xac] sm:$0xf]
    %v1160 = vld [vmem:[#allocation8 + $0xb0] sm:$0xf]
    %v1161 = vld [vmem:[#allocation8 + $0xb4] sm:$0xf]
    %v1162 = vld [vmem:[#allocation8 + $0xb8] sm:$0xf]
    %v1163 = vld [vmem:[#allocation8 + $0xbc] sm:$0xf]
    %v1164 = vld [vmem:[#allocation8 + $0xc0] sm:$0xf]
    %v1165 = vld [vmem:[#allocation8 + $0xc4] sm:$0xf]
    %v1166 = vld [vmem:[#allocation8 + $0xc8] sm:$0xf]
    %v1167 = vld [vmem:[#allocation8 + $0xcc] sm:$0xf]
    %v1168 = vld [vmem:[#allocation8 + $0xd0] sm:$0xf]
    %v1169 = vld [vmem:[#allocation8 + $0xd4] sm:$0xf]
    %v1170 = vld [vmem:[#allocation8 + $0xd8] sm:$0xf]
    %v1171 = vld [vmem:[#allocation8 + $0xdc] sm:$0xf]
    %v1172 = vld [vmem:[#allocation8 + $0xe0] sm:$0xf]
    %v1173 = vld [vmem:[#allocation8 + $0xe4] sm:$0xf]
    %v1174 = vld [vmem:[#allocation8 + $0xe8] sm:$0xf]
    %v1175 = vld [vmem:[#allocation8 + $0xec] sm:$0xf]
    %v1176 = vld [vmem:[#allocation8 + $0xf0] sm:$0xf]
    %v1177 = vld [vmem:[#allocation8 + $0xf4] sm:$0xf]
    %v1178 = vld [vmem:[#allocation8 + $0xf8] sm:$0xf]
    %v1179 = vld [vmem:[#allocation8 + $0xfc] sm:$0xf]
    %v1180 = vld [vmem:[%s6] sm:$0x1]
    %v1182 = vlaneseq
    %v1183 = vshrl.u32 %v1182, 7
    %v1184 = vsub.s32 0, %v1183
    %v1185 = vrot.slane %v1180, %v1184
    %v1251 = vunpack.c.l.b16 %v1116
    %v1252 = vunpack.c.l.b16 %v1117
    %v1253 = vunpack.c.l.b16 %v1118
    %v1254 = vunpack.c.l.b16 %v1119
    %v1255 = vunpack.c.l.b16 %v1120
    %v1256 = vunpack.c.l.b16 %v1121
    %v1257 = vunpack.c.l.b16 %v1122
    %v1258 = vunpack.c.l.b16 %v1123
    %v1259 = vunpack.c.l.b16 %v1124
    %v1260 = vunpack.c.l.b16 %v1125
    %v1261 = vunpack.c.l.b16 %v1126
    %v1262 = vunpack.c.l.b16 %v1127
    %v1263 = vunpack.c.l.b16 %v1128
    %v1264 = vunpack.c.l.b16 %v1129
    %v1265 = vunpack.c.l.b16 %v1130
    %v1266 = vunpack.c.l.b16 %v1131
    %v1267 = vunpack.c.l.b16 %v1132
    %v1268 = vunpack.c.l.b16 %v1133
    %v1269 = vunpack.c.l.b16 %v1134
    %v1270 = vunpack.c.l.b16 %v1135
    %v1271 = vunpack.c.l.b16 %v1136
    %v1272 = vunpack.c.l.b16 %v1137
    %v1273 = vunpack.c.l.b16 %v1138
    %v1274 = vunpack.c.l.b16 %v1139
    %v1275 = vunpack.c.l.b16 %v1140
    %v1276 = vunpack.c.l.b16 %v1141
    %v1277 = vunpack.c.l.b16 %v1142
    %v1278 = vunpack.c.l.b16 %v1143
    %v1279 = vunpack.c.l.b16 %v1144
    %v1280 = vunpack.c.l.b16 %v1145
    %v1281 = vunpack.c.l.b16 %v1146
    %v1282 = vunpack.c.l.b16 %v1147
    %v1283 = vunpack.c.l.b16 %v1148
    %v1284 = vunpack.c.l.b16 %v1149
    %v1285 = vunpack.c.l.b16 %v1150
    %v1286 = vunpack.c.l.b16 %v1151
    %v1287 = vunpack.c.l.b16 %v1152
    %v1288 = vunpack.c.l.b16 %v1153
    %v1289 = vunpack.c.l.b16 %v1154
    %v1290 = vunpack.c.l.b16 %v1155
    %v1291 = vunpack.c.l.b16 %v1156
    %v1292 = vunpack.c.l.b16 %v1157
    %v1293 = vunpack.c.l.b16 %v1158
    %v1294 = vunpack.c.l.b16 %v1159
    %v1295 = vunpack.c.l.b16 %v1160
    %v1296 = vunpack.c.l.b16 %v1161
    %v1297 = vunpack.c.l.b16 %v1162
    %v1298 = vunpack.c.l.b16 %v1163
    %v1299 = vunpack.c.l.b16 %v1164
    %v1300 = vunpack.c.l.b16 %v1165
    %v1301 = vunpack.c.l.b16 %v1166
    %v1302 = vunpack.c.l.b16 %v1167
    %v1303 = vunpack.c.l.b16 %v1168
    %v1304 = vunpack.c.l.b16 %v1169
    %v1305 = vunpack.c.l.b16 %v1170
    %v1306 = vunpack.c.l.b16 %v1171
    %v1307 = vunpack.c.l.b16 %v1172
    %v1308 = vunpack.c.l.b16 %v1173
    %v1309 = vunpack.c.l.b16 %v1174
    %v1310 = vunpack.c.l.b16 %v1175
    %v1311 = vunpack.c.l.b16 %v1176
    %v1312 = vunpack.c.l.b16 %v1177
    %v1313 = vunpack.c.l.b16 %v1178
    %v1314 = vunpack.c.l.b16 %v1179
    %v1315 = vpack.c.b16 %v1252, %v1251
    %v1316 = vpack.c.b16 %v1254, %v1253
    %v1317 = vpack.c.b16 %v1256, %v1255
    %v1318 = vpack.c.b16 %v1258, %v1257
    %v1319 = vpack.c.b16 %v1260, %v1259
    %v1320 = vpack.c.b16 %v1262, %v1261
    %v1321 = vpack.c.b16 %v1264, %v1263
    %v1322 = vpack.c.b16 %v1266, %v1265
    %v1323 = vpack.c.b16 %v1268, %v1267
    %v1324 = vpack.c.b16 %v1270, %v1269
    %v1325 = vpack.c.b16 %v1272, %v1271
    %v1326 = vpack.c.b16 %v1274, %v1273
    %v1327 = vpack.c.b16 %v1276, %v1275
    %v1328 = vpack.c.b16 %v1278, %v1277
    %v1329 = vpack.c.b16 %v1280, %v1279
    %v1330 = vpack.c.b16 %v1282, %v1281
    %v1331 = vpack.c.b16 %v1284, %v1283
    %v1332 = vpack.c.b16 %v1286, %v1285
    %v1333 = vpack.c.b16 %v1288, %v1287
    %v1334 = vpack.c.b16 %v1290, %v1289
    %v1335 = vpack.c.b16 %v1292, %v1291
    %v1336 = vpack.c.b16 %v1294, %v1293
    %v1337 = vpack.c.b16 %v1296, %v1295
    %v1338 = vpack.c.b16 %v1298, %v1297
    %v1339 = vpack.c.b16 %v1300, %v1299
    %v1340 = vpack.c.b16 %v1302, %v1301
    %v1341 = vpack.c.b16 %v1304, %v1303
    %v1342 = vpack.c.b16 %v1306, %v1305
    %v1343 = vpack.c.b16 %v1308, %v1307
    %v1344 = vpack.c.b16 %v1310, %v1309
    %v1345 = vpack.c.b16 %v1312, %v1311
    %v1346 = vpack.c.b16 %v1314, %v1313
    %1379 = vmatprep.subr.bf16.mxu0 0
    %1380 = vmatpush1.bf16.msra.mxu0 %v1322
    %1381 = vmatprep.subr.bf16.mxu0 0
    %1382 = vmatpush1.bf16.msra.mxu0 %v1321
    %1383 = vmatprep.subr.bf16.mxu0 0
    %1384 = vmatpush1.bf16.msra.mxu0 %v1320
    %1385 = vmatprep.subr.bf16.mxu0 0
    %1386 = vmatpush1.bf16.msra.mxu0 %v1319
    %1387 = vmatprep.subr.bf16.mxu0 0
    %1388 = vmatpush1.bf16.msra.mxu0 %v1318
    %1389 = vmatprep.subr.bf16.mxu0 0
    %1390 = vmatpush1.bf16.msra.mxu0 %v1317
    %1391 = vmatprep.subr.bf16.mxu0 0
    %1392 = vmatpush1.bf16.msra.mxu0 %v1316
    %1393 = vmatprep.subr.bf16.mxu0 0
    %1394 = vmatpush1.bf16.msra.mxu0 %v1315
    %1395 = vmatprep.subr.bf16.mxu0 0
    %1396 = vmatpush2.bf16.msra.mxu0 %v1330
    %1397 = vmatprep.subr.bf16.mxu0 0
    %1398 = vmatpush2.bf16.msra.mxu0 %v1329
    %1399 = vmatprep.subr.bf16.mxu0 0
    %1400 = vmatpush2.bf16.msra.mxu0 %v1328
    %1401 = vmatprep.subr.bf16.mxu0 0
    %1402 = vmatpush2.bf16.msra.mxu0 %v1327
    %1403 = vmatprep.subr.bf16.mxu0 0
    %1404 = vmatpush2.bf16.msra.mxu0 %v1326
    %1405 = vmatprep.subr.bf16.mxu0 0
    %1406 = vmatpush2.bf16.msra.mxu0 %v1325
    %1407 = vmatprep.subr.bf16.mxu0 0
    %1408 = vmatpush2.bf16.msra.mxu0 %v1324
    %1409 = vmatprep.subr.bf16.mxu0 0
    %1410 = vmatpush2.bf16.msra.mxu0 %v1323
    %1411 = vmatprep.mubr.bf16.mxu0 %v1113
    %1412 = vmatmul.mubr.bf16.gmra.mxu0 %v1112
    %v1413 = vpop.f32.mrf.mxu0
    %v1414 = vadd.f32 %v1185, %v1413
    %v1415 = vpop.f32.mrf.mxu0
    %v1416 = vpop.f32.mrf.mxu0
    %v1417 = vpop.f32.mrf.mxu0
    %1418 = vdwg.mxu0
    %1419 = vmatprep.subr.bf16.mxu0 0
    %1420 = vmatpush1.bf16.msra.mxu0 %v1338
    %1421 = vmatprep.subr.bf16.mxu0 0
    %1422 = vmatpush1.bf16.msra.mxu0 %v1337
    %1423 = vmatprep.subr.bf16.mxu0 0
    %1424 = vmatpush1.bf16.msra.mxu0 %v1336
    %1425 = vmatprep.subr.bf16.mxu0 0
    %1426 = vmatpush1.bf16.msra.mxu0 %v1335
    %1427 = vmatprep.subr.bf16.mxu0 0
    %1428 = vmatpush1.bf16.msra.mxu0 %v1334
    %1429 = vmatprep.subr.bf16.mxu0 0
    %1430 = vmatpush1.bf16.msra.mxu0 %v1333
    %1431 = vmatprep.subr.bf16.mxu0 0
    %1432 = vmatpush1.bf16.msra.mxu0 %v1332
    %1433 = vmatprep.subr.bf16.mxu0 0
    %1434 = vmatpush1.bf16.msra.mxu0 %v1331
    %1435 = vmatprep.subr.bf16.mxu0 0
    %1436 = vmatpush2.bf16.msra.mxu0 %v1346
    %1437 = vmatprep.subr.bf16.mxu0 0
    %1438 = vmatpush2.bf16.msra.mxu0 %v1345
    %1439 = vmatprep.subr.bf16.mxu0 0
    %1440 = vmatpush2.bf16.msra.mxu0 %v1344
    %1441 = vmatprep.subr.bf16.mxu0 0
    %1442 = vmatpush2.bf16.msra.mxu0 %v1343
    %1443 = vmatprep.subr.bf16.mxu0 0
    %1444 = vmatpush2.bf16.msra.mxu0 %v1342
    %1445 = vmatprep.subr.bf16.mxu0 0
    %1446 = vmatpush2.bf16.msra.mxu0 %v1341
    %1447 = vmatprep.subr.bf16.mxu0 0
    %1448 = vmatpush2.bf16.msra.mxu0 %v1340
    %1449 = vmatprep.subr.bf16.mxu0 0
    %1450 = vmatpush2.bf16.msra.mxu0 %v1339
    %1451 = vmatprep.mubr.bf16.mxu0 %v1115
    %1452 = vmatmul.mubr.bf16.gmra.mxu0 %v1114
    %v1453 = vpop.f32.mrf.mxu0
    %v1454 = vadd.f32 %v1414, %v1453
    %v1455 = vpop.f32.mrf.mxu0
    %v1456 = vpop.f32.mrf.mxu0
    %v1457 = vpop.f32.mrf.mxu0
    %1458 = vdwg.mxu0
    %1459 = vst [vmem:[#allocation10] sm:$0xff] %v1454
    // Predicated region
    $region46: #{tpu_custom_call.1} parent=1 // pred_check
      _
    $region47: #{tpu_custom_call.1} parent=1 // pred_check_branch
      %1461 = sbr.rel (0) target = $region49
    $region48: #{tpu_custom_call.1} parent=1 // pred_region
      %s1463 = ssub.s32 128, 128
      %1464 = vsyncadd [#allocation4], %s1463
      %s1466 = sshll.u32 [#allocation10], 4
      %s1467 = int_to_ptr.vmem [resolvable:$true] %s1466
      %1469 = dma.vmem_to_hbm [thread:$0]  %s1467, 128, %s7, [#allocation4]
    $region49: #{tpu_custom_call.1} parent=1 // pred_fallthru
      _
    // Predicated region
    $region50: #{tpu_custom_call.1} parent=1 // pred_check
      _
    $region51: #{tpu_custom_call.1} parent=1 // pred_check_branch
      %1471 = sbr.rel (0) target = $region53
    $region52: #{tpu_custom_call.1} parent=1 // pred_region
      %1472 = dma.done [#allocation4], 128
    $region53: #{tpu_custom_call.1} parent=1 // pred_fallthru
      _
    %1473 = vsyncpa [#allocation3], 1
    %1474 = vsyncpa [#allocation6], 1
    %1475 = vsyncpa [#allocation9], 1
    %1476 = vsyncpa [#allocation4], 1

</llo_original>
